<compile_context>
chip_gen: v7x
topology: tpu7x:2x2x1
jax: 0.10.0
libtpu: 0.0.40
codegen_flags: <defaults>
</compile_context>

<pallas_src>
import math
import functools

import jax
import jax.numpy as jnp
from jax.experimental import pallas as pl
from jax.experimental.pallas import tpu as pltpu


def _round_up(v, m):
    return (v + m - 1) // m * m


# --------------------------------------------------------------------------- #
# Kernels
# --------------------------------------------------------------------------- #
def _libra_kernel_single_k(x_ref, wa_ref, wb_ref, o_ref):
    # Whole reduction (K) in one tile: no scratch, no K loop, fully fused.
    # x_ref : (tm, K)   wa_ref : (K, Rp)   wb_ref : (Rp, Np)   o_ref : (tm, Np)
    hidden = jnp.dot(x_ref[...], wa_ref[...], preferred_element_type=jnp.float32)
    hidden = hidden.astype(x_ref.dtype)      # fast bf16 MXU path when applicable
    out = jnp.dot(hidden, wb_ref[...], preferred_element_type=jnp.float32)
    o_ref[...] = out.astype(o_ref.dtype)


def _libra_kernel_multi_k(x_ref, wa_ref, wb_ref, o_ref, hid_ref):
    # x_ref  : (tm, tk)        activation tile
    # wa_ref : (tk, Rp)        A.T tile (down-projection), advances with K step
    # wb_ref : (Rp, Np)        B.T (up-projection), VMEM-resident over the grid
    # o_ref  : (tm, Np)        lane-dense output tile (written at last K step)
    # hid_ref: (tm, Rp) f32    hidden accumulator carried across K steps
    k = pl.program_id(1)

    @pl.when(k == 0)
    def _():
        hid_ref[...] = jnp.zeros_like(hid_ref)

    hid_ref[...] += jnp.dot(x_ref[...], wa_ref[...],
                            preferred_element_type=jnp.float32)

    @pl.when(k == pl.num_programs(1) - 1)
    def _():
        hidden = hid_ref[...].astype(x_ref.dtype)
        out = jnp.dot(hidden, wb_ref[...], preferred_element_type=jnp.float32)
        o_ref[...] = out.astype(o_ref.dtype)


# --------------------------------------------------------------------------- #
# Wrapper
# --------------------------------------------------------------------------- #
@functools.partial(jax.jit, static_argnames=("use_pallas",))
def libra_linear(x, weight_A, weight_B, use_pallas=True):
    """Fused low-rank linear: (x @ A.T) @ B.T.

    x        : (batch, seq, in_features)
    weight_A : (r, in_features)           with r = out_features // down_ratio
    weight_B : (out_features, r)
    returns  : (batch, seq, out_features)
    """
    B, S, K = x.shape
    R, K2 = weight_A.shape
    N, R2 = weight_B.shape
    assert K == K2 and R == R2

    def xla_path():
        out = (x.reshape(-1, K) @ weight_A.T) @ weight_B.T
        return out.reshape(B, S, N)

    if not use_pallas:
        return xla_path()

    M = B * S
    isz = jnp.dtype(x.dtype).itemsize

    # ---- padded problem dimensions ----------------------------------------
    R_pad = _round_up(R, 128)   # lane-dense hidden + clean A.T / B.T layouts
    N_pad = _round_up(N, 128)   # lane-dense output -> unmasked full-width stores

    # K tiling: single tile when small, otherwise 512-wide reduction chunks.
    if K <= 512:
        tk, K_pad = K, K
    else:
        tk = 512
        K_pad = _round_up(K, tk)
    nk = K_pad // tk

    # ---- M tile selection under a VMEM budget ------------------------------
    VMEM_CAP = 48 * 2 ** 20     # headroom below v7x's 64 MiB per-TC VMEM
    resident = (R_pad * N_pad * isz          # wb (grid-resident)
                + 2 * tk * R_pad * isz)      # wa (double-buffered per K tile)

    def per_tile_bytes(tm):
        return (2 * tm * tk * isz            # x   (double-buffered)
                + 2 * tm * N_pad * isz       # out (double-buffered)
                + tm * R_pad * 4)            # f32 hidden accumulator

    tm = min(256, _round_up(M, 8))
    while tm > 8 and resident + per_tile_bytes(tm) > VMEM_CAP:
        tm = max(8, (tm // 2) // 8 * 8)

    if resident + per_tile_bytes(tm) > VMEM_CAP:
        # Weights alone don't fit comfortably in VMEM -> plain XLA is safer.
        # TODO(synk): add an N-tiled variant for very large out_features.
        return xla_path()

    M_pad = _round_up(M, tm)
    nm = M_pad // tm

    # ---- operand preparation (transpose + zero padding, once, in XLA) ------
    x2d = x.reshape(M, K)
    if M_pad != M or K_pad != K:
        x2d = jnp.pad(x2d, ((0, M_pad - M), (0, K_pad - K)))

    wa_t = weight_A.T                                   # (K, R)
    if K_pad != K or R_pad != R:
        wa_t = jnp.pad(wa_t, ((0, K_pad - K), (0, R_pad - R)))
    wb_t = weight_B.T                                   # (R, N)
    if R_pad != R or N_pad != N:
        wb_t = jnp.pad(wb_t, ((0, R_pad - R), (0, N_pad - N)))

    vmem_est = resident + per_tile_bytes(tm)
    vmem_limit = int(min(max(2 * vmem_est, 16 * 2 ** 20), 64 * 2 ** 20))

    cost = pl.CostEstimate(
        flops=2 * M * R * K + 2 * M * N * R,
        transcendentals=0,
        bytes_accessed=(x.size * isz
                        + weight_A.size * jnp.dtype(weight_A.dtype).itemsize
                        + weight_B.size * jnp.dtype(weight_B.dtype).itemsize
                        + M * N * isz),
    )

    if nk == 1:
        out2d = pl.pallas_call(
            _libra_kernel_single_k,
            out_shape=jax.ShapeDtypeStruct((M_pad, N_pad), x.dtype),
            grid=(nm,),
            in_specs=[
                pl.BlockSpec((tm, K_pad), lambda i: (i, 0)),       # x tile
                pl.BlockSpec((K_pad, R_pad), lambda i: (0, 0)),    # A.T (resident)
                pl.BlockSpec((R_pad, N_pad), lambda i: (0, 0)),    # B.T (resident)
            ],
            out_specs=pl.BlockSpec((tm, N_pad), lambda i: (i, 0)),
            compiler_params=pltpu.CompilerParams(
                dimension_semantics=("parallel",),
                vmem_limit_bytes=vmem_limit,
            ),
            cost_estimate=cost,
        )(x2d, wa_t, wb_t)
    else:
        out2d = pl.pallas_call(
            _libra_kernel_multi_k,
            out_shape=jax.ShapeDtypeStruct((M_pad, N_pad), x.dtype),
            grid=(nm, nk),
            in_specs=[
                pl.BlockSpec((tm, tk), lambda i, k: (i, k)),       # x tile
                pl.BlockSpec((tk, R_pad), lambda i, k: (k, 0)),    # A.T K-tile
                pl.BlockSpec((R_pad, N_pad), lambda i, k: (0, 0)), # B.T (resident)
            ],
            out_specs=pl.BlockSpec((tm, N_pad), lambda i, k: (i, 0)),
            scratch_shapes=[pltpu.VMEM((tm, R_pad), jnp.float32)],
            compiler_params=pltpu.CompilerParams(
                dimension_semantics=("parallel", "arbitrary"),
                vmem_limit_bytes=vmem_limit,
            ),
            cost_estimate=cost,
        )(x2d, wa_t, wb_t)

    return out2d[:M, :N].reshape(B, S, N)


# --------------------------------------------------------------------------- #
# Init + demo
# --------------------------------------------------------------------------- #
def _kaiming_uniform(key, shape, a=math.sqrt(5), dtype=jnp.float32):
    # Matches torch.nn.init.kaiming_uniform_ (fan_in mode, leaky_relu gain).
    fan_in = shape[1]
    gain = math.sqrt(2.0 / (1.0 + a * a))
    bound = gain * math.sqrt(3.0 / fan_in)
    return jax.random.uniform(key, shape, dtype=dtype, minval=-bound, maxval=bound)


if __name__ == "__main__":
    # Module config: in_features=32, out_features=32, down_ratio=4 -> r = 8
    in_features = 32
    out_features = 32
    down_ratio = 4
    r = out_features // down_ratio

    batch, seq = 2, 8

    key = jax.random.PRNGKey(0)
    kx, ka, kb = jax.random.split(key, 3)

    x = jax.random.normal(kx, (batch, seq, in_features), dtype=jnp.float32)
    weight_A = _kaiming_uniform(ka, (r, in_features))        # (r, in_features)
    weight_B = _kaiming_uniform(kb, (out_features, r))       # (out_features, r)

    out = libra_linear(x, weight_A, weight_B)                # Pallas path
    out = jax.block_until_ready(out)

    # Reference check (plain JAX, same math as the two F.linear calls).
    ref = (x.reshape(-1, in_features) @ weight_A.T) @ weight_B.T
    ref = ref.reshape(batch, seq, out_features)
    assert jnp.allclose(out, ref, atol=1e-5, rtol=1e-5), "mismatch vs reference"

    print("KERNEL_OK")
</pallas_src>

<mosaic_0001>
module attributes {stable_mosaic.version = 11 : i64} {
  func.func @_libra_kernel_single_k(%arg0: i32, %arg1: memref<16x32xf32, #tpu.memory_space<vmem>>, %arg2: memref<32x128xf32, #tpu.memory_space<vmem>>, %arg3: memref<128x128xf32, #tpu.memory_space<vmem>>, %arg4: memref<16x128xf32, #tpu.memory_space<vmem>>) attributes {dimension_semantics = [#tpu.dimension_semantics<parallel>], iteration_bounds = array<i64: 1>, scalar_prefetch = 0 : i64, scratch_operands = 0 : i64, tpu.core_type = #tpu.core_type<tc>, window_params = [{transform_indices = @transform_0, window_bounds = array<i64: 16, 32>}, {pipeline_mode = #tpu.pipeline_mode<synchronous>, transform_indices = @transform_1, window_bounds = array<i64: 32, 128>}, {pipeline_mode = #tpu.pipeline_mode<synchronous>, transform_indices = @transform_2, window_bounds = array<i64: 128, 128>}, {transform_indices = @transform_3, window_bounds = array<i64: 16, 128>}]} {
    %c0 = arith.constant 0 : index
    %c0_0 = arith.constant 0 : index
    %0 = vector.load %arg1[%c0, %c0_0] : memref<16x32xf32, #tpu.memory_space<vmem>>, vector<16x32xf32>
    %c0_1 = arith.constant 0 : index
    %c0_2 = arith.constant 0 : index
    %1 = vector.load %arg2[%c0_1, %c0_2] : memref<32x128xf32, #tpu.memory_space<vmem>>, vector<32x128xf32>
    %cst = arith.constant dense<0.000000e+00> : vector<16x128xf32>
    %2 = tpu.matmul %0, %1, %cst {dimension_numbers = #tpu.dot_dimension_numbers<[1], [0], [0], [1], [0, 0, 1, 1], [], []>} : vector<16x32xf32>, vector<32x128xf32>, vector<16x128xf32> -> vector<16x128xf32>
    %c0_3 = arith.constant 0 : index
    %c0_4 = arith.constant 0 : index
    %3 = vector.load %arg3[%c0_3, %c0_4] : memref<128x128xf32, #tpu.memory_space<vmem>>, vector<128x128xf32>
    %cst_5 = arith.constant dense<0.000000e+00> : vector<16x128xf32>
    %4 = tpu.matmul %2, %3, %cst_5 {dimension_numbers = #tpu.dot_dimension_numbers<[1], [0], [0], [1], [0, 0, 1, 1], [], []>} : vector<16x128xf32>, vector<128x128xf32>, vector<16x128xf32> -> vector<16x128xf32>
    %c0_6 = arith.constant 0 : index
    %c0_7 = arith.constant 0 : index
    %5 = vector.load %arg4[%c0_6, %c0_7] : memref<16x128xf32, #tpu.memory_space<vmem>>, vector<16x128xf32>
    tpu.vector_store %arg4[%c0_6, %c0_7], %4 {strides = array<i32>} : memref<16x128xf32, #tpu.memory_space<vmem>>, vector<16x128xf32>,
    return
  }
  func.func @transform_0(%arg0: i32) -> (i32, i32) {
    %c0_i32 = arith.constant 0 : i32
    %c0_i32_0 = arith.constant 0 : i32
    return %arg0, %c0_i32 : i32, i32
  }
  func.func @transform_1(%arg0: i32) -> (i32, i32) {
    %c0_i32 = arith.constant 0 : i32
    %c0_i32_0 = arith.constant 0 : i32
    %c0_i32_1 = arith.constant 0 : i32
    return %c0_i32, %c0_i32_0 : i32, i32
  }
  func.func @transform_2(%arg0: i32) -> (i32, i32) {
    %c0_i32 = arith.constant 0 : i32
    %c0_i32_0 = arith.constant 0 : i32
    %c0_i32_1 = arith.constant 0 : i32
    return %c0_i32, %c0_i32_0 : i32, i32
  }
  func.func @transform_3(%arg0: i32) -> (i32, i32) {
    %c0_i32 = arith.constant 0 : i32
    %c0_i32_0 = arith.constant 0 : i32
    return %arg0, %c0_i32 : i32, i32
  }
}

</mosaic_0001>

<llo_original>
// kernel: libra_linear.1
$region0: #{libra_linear.1}
  #allocation0 [shape = 'u32[]', space=smem, size = 0x4, offset = 0x4, fixed_abs, tag = 'smem constant byte address 0x4 - core index']
  #allocation1 [shape = 'u32[144,128]{1,0:T(1,128)}', space=vmem, size = 0x12000, scoped, tag = 'internal scratch']
  %s0 = inlined_call_operand.vmem [shape: f32[16,32], index: 0, kind: input, shape index: {}]
  %s1 = inlined_call_operand.vmem [shape: f32[32,128], index: 1, kind: input, shape index: {}]
  %s2 = inlined_call_operand.vmem [shape: f32[128,128], index: 2, kind: input, shape index: {}]
  %s3 = inlined_call_operand.vmem [shape: f32[16,128], index: 3, kind: output, shape index: {}]
  %s4 = sld [smem:[#allocation0]]
  $region22: #{libra_linear.1} parent=0
    _
  %s6 = ssub.s32 1, %s4
  %s7 = scalar_select 0, %s6, %s4
  // Predicated region
  $region2: #{libra_linear.1} parent=0 // pred_check
    _
  $region3: #{libra_linear.1} parent=0 // pred_check_branch
    %9 = sbr.rel (0) target = $region5
  $region4: #{libra_linear.1} parent=0 // pred_region
    _
  $region5: #{libra_linear.1} parent=0 // pred_fallthru
    _
  // Predicated region
  $region6: #{libra_linear.1} parent=0 // pred_check
    _
  $region7: #{libra_linear.1} parent=0 // pred_check_branch
    %11 = sbr.rel (0) target = $region9
  $region8: #{libra_linear.1} parent=0 // pred_region
    _
  $region9: #{libra_linear.1} parent=0 // pred_fallthru
    _
  // Predicated region
  $region10: #{libra_linear.1} parent=0 // pred_check
    _
  $region11: #{libra_linear.1} parent=0 // pred_check_branch
    %13 = sbr.rel (0) target = $region13
  $region12: #{libra_linear.1} parent=0 // pred_region
    _
  $region13: #{libra_linear.1} parent=0 // pred_fallthru
    _
  %v14 = vld [vmem:[%s0] sm:$0xff]
  %v15 = vld [vmem:[%s0 + $0x8] sm:$0xff]
  %v16 = vld [vmem:[%s1] sm:$0xff]
  %v17 = vld [vmem:[%s1 + $0x8] sm:$0xff]
  %v18 = vld [vmem:[%s1 + $0x10] sm:$0xff]
  %v19 = vld [vmem:[%s1 + $0x18] sm:$0xff]
  %vm20 = vcmask 261120
  %v22 = vsel %vm20, %v14, 0
  %v25 = vsel %vm20, %v15, 0
  %27 = vmatprep.subr.mxu0 0.0
  %28 = vmatpush1.msra.mxu0 %v16
  %29 = vmatprep.subr.mxu0 0.0
  %30 = vmatpush1.msra.mxu0 %v17
  %31 = vmatprep.subr.mxu0 0.0
  %32 = vmatpush1.msra.mxu0 %v18
  %33 = vmatprep.subr.mxu0 0.0
  %34 = vmatpush1.msra.mxu0 %v19
  %35 = vmatprep.subr.mxu0 0.0
  %36 = vmatpush1.msra.mxu0 0.0
  %37 = vmatprep.subr.mxu0 0.0
  %38 = vmatpush1.msra.mxu0 0.0
  %39 = vmatprep.subr.mxu0 0.0
  %40 = vmatpush1.msra.mxu0 0.0
  %41 = vmatprep.subr.mxu0 0.0
  %42 = vmatpush1.msra.mxu0 0.0
  %43 = vmatprep.subr.mxu0 0.0
  %44 = vmatpush1.msra.mxu0 0.0
  %45 = vmatprep.subr.mxu0 0.0
  %46 = vmatpush1.msra.mxu0 0.0
  %47 = vmatprep.subr.mxu0 0.0
  %48 = vmatpush1.msra.mxu0 0.0
  %49 = vmatprep.subr.mxu0 0.0
  %50 = vmatpush1.msra.mxu0 0.0
  %51 = vmatprep.subr.mxu0 0.0
  %52 = vmatpush1.msra.mxu0 0.0
  %53 = vmatprep.subr.mxu0 0.0
  %54 = vmatpush1.msra.mxu0 0.0
  %55 = vmatprep.subr.mxu0 0.0
  %56 = vmatpush1.msra.mxu0 0.0
  %57 = vmatprep.subr.mxu0 0.0
  %58 = vmatpush1.msra.mxu0 0.0
  %59 = vmatprep.subr.mxu0 0.0
  %60 = vmatpush1.msra.mxu0 0.0
  %61 = vmatprep.subr.mxu0 0.0
  %62 = vmatpush1.msra.mxu0 0.0
  %63 = vmatprep.subr.mxu0 0.0
  %64 = vmatpush1.msra.mxu0 0.0
  %65 = vmatprep.subr.mxu0 0.0
  %66 = vmatpush1.msra.mxu0 0.0
  %67 = vmatprep.subr.mxu0 0.0
  %68 = vmatpush1.msra.mxu0 0.0
  %69 = vmatprep.subr.mxu0 0.0
  %70 = vmatpush1.msra.mxu0 0.0
  %71 = vmatprep.subr.mxu0 0.0
  %72 = vmatpush1.msra.mxu0 0.0
  %73 = vmatprep.subr.mxu0 0.0
  %74 = vmatpush1.msra.mxu0 0.0
  %75 = vmatprep.subr.mxu0 0.0
  %76 = vmatpush1.msra.mxu0 0.0
  %77 = vmatprep.subr.mxu0 0.0
  %78 = vmatpush1.msra.mxu0 0.0
  %79 = vmatprep.subr.mxu0 0.0
  %80 = vmatpush1.msra.mxu0 0.0
  %81 = vmatprep.subr.mxu0 0.0
  %82 = vmatpush1.msra.mxu0 0.0
  %83 = vmatprep.subr.mxu0 0.0
  %84 = vmatpush1.msra.mxu0 0.0
  %85 = vmatprep.subr.mxu0 0.0
  %86 = vmatpush1.msra.mxu0 0.0
  %87 = vmatprep.subr.mxu0 0.0
  %88 = vmatpush1.msra.mxu0 0.0
  %89 = vmatprep.subr.mxu0 0.0
  %90 = vmatpush1.msra.mxu0 0.0
  %91 = vmatprep.mubr.f32.mxu0 0.0
  %92 = vmatmul.mubr.f32.gmra.mrb[0].mxu0 %v22
  %v93 = vpop.f32.mrb[0].mxu0
  %v94 = vadd.f32 0.0, %v93
  %v95 = vpop.f32.mrb[0].mxu0
  %96 = vmatprep.mubr.f32.mxu0 0.0
  %97 = vmatmul.mubr.f32.gmra.mrb[0].mxu0 %v25
  %v98 = vpop.f32.mrb[0].mxu0
  %v99 = vadd.f32 0.0, %v98
  %v100 = vpop.f32.mrb[0].mxu0
  %101 = vdwg.mxu0
  %v102 = vld [vmem:[%s2] sm:$0xff]
  %v103 = vld [vmem:[%s2 + $0x8] sm:$0xff]
  %v104 = vld [vmem:[%s2 + $0x10] sm:$0xff]
  %v105 = vld [vmem:[%s2 + $0x18] sm:$0xff]
  %v106 = vld [vmem:[%s2 + $0x20] sm:$0xff]
  %v107 = vld [vmem:[%s2 + $0x28] sm:$0xff]
  %v108 = vld [vmem:[%s2 + $0x30] sm:$0xff]
  %v109 = vld [vmem:[%s2 + $0x38] sm:$0xff]
  %v110 = vld [vmem:[%s2 + $0x40] sm:$0xff]
  %v111 = vld [vmem:[%s2 + $0x48] sm:$0xff]
  %v112 = vld [vmem:[%s2 + $0x50] sm:$0xff]
  %v113 = vld [vmem:[%s2 + $0x58] sm:$0xff]
  %v114 = vld [vmem:[%s2 + $0x60] sm:$0xff]
  %v115 = vld [vmem:[%s2 + $0x68] sm:$0xff]
  %v116 = vld [vmem:[%s2 + $0x70] sm:$0xff]
  %v117 = vld [vmem:[%s2 + $0x78] sm:$0xff]
  %118 = vmatprep.subr.mxu0 0.0
  %119 = vmatpush1.msra.mxu0 %v102
  %120 = vmatprep.subr.mxu0 0.0
  %121 = vmatpush1.msra.mxu0 %v103
  %122 = vmatprep.subr.mxu0 0.0
  %123 = vmatpush1.msra.mxu0 %v104
  %124 = vmatprep.subr.mxu0 0.0
  %125 = vmatpush1.msra.mxu0 %v105
  %126 = vmatprep.subr.mxu0 0.0
  %127 = vmatpush1.msra.mxu0 %v106
  %128 = vmatprep.subr.mxu0 0.0
  %129 = vmatpush1.msra.mxu0 %v107
  %130 = vmatprep.subr.mxu0 0.0
  %131 = vmatpush1.msra.mxu0 %v108
  %132 = vmatprep.subr.mxu0 0.0
  %133 = vmatpush1.msra.mxu0 %v109
  %134 = vmatprep.subr.mxu0 0.0
  %135 = vmatpush1.msra.mxu0 %v110
  %136 = vmatprep.subr.mxu0 0.0
  %137 = vmatpush1.msra.mxu0 %v111
  %138 = vmatprep.subr.mxu0 0.0
  %139 = vmatpush1.msra.mxu0 %v112
  %140 = vmatprep.subr.mxu0 0.0
  %141 = vmatpush1.msra.mxu0 %v113
  %142 = vmatprep.subr.mxu0 0.0
  %143 = vmatpush1.msra.mxu0 %v114
  %144 = vmatprep.subr.mxu0 0.0
  %145 = vmatpush1.msra.mxu0 %v115
  %146 = vmatprep.subr.mxu0 0.0
  %147 = vmatpush1.msra.mxu0 %v116
  %148 = vmatprep.subr.mxu0 0.0
  %149 = vmatpush1.msra.mxu0 %v117
  %150 = vmatprep.subr.mxu0 0.0
  %151 = vmatpush1.msra.mxu0 0.0
  %152 = vmatprep.subr.mxu0 0.0
  %153 = vmatpush1.msra.mxu0 0.0
  %154 = vmatprep.subr.mxu0 0.0
  %155 = vmatpush1.msra.mxu0 0.0
  %156 = vmatprep.subr.mxu0 0.0
  %157 = vmatpush1.msra.mxu0 0.0
  %158 = vmatprep.subr.mxu0 0.0
  %159 = vmatpush1.msra.mxu0 0.0
  %160 = vmatprep.subr.mxu0 0.0
  %161 = vmatpush1.msra.mxu0 0.0
  %162 = vmatprep.subr.mxu0 0.0
  %163 = vmatpush1.msra.mxu0 0.0
  %164 = vmatprep.subr.mxu0 0.0
  %165 = vmatpush1.msra.mxu0 0.0
  %166 = vmatprep.subr.mxu0 0.0
  %167 = vmatpush1.msra.mxu0 0.0
  %168 = vmatprep.subr.mxu0 0.0
  %169 = vmatpush1.msra.mxu0 0.0
  %170 = vmatprep.subr.mxu0 0.0
  %171 = vmatpush1.msra.mxu0 0.0
  %172 = vmatprep.subr.mxu0 0.0
  %173 = vmatpush1.msra.mxu0 0.0
  %174 = vmatprep.subr.mxu0 0.0
  %175 = vmatpush1.msra.mxu0 0.0
  %176 = vmatprep.subr.mxu0 0.0
  %177 = vmatpush1.msra.mxu0 0.0
  %178 = vmatprep.subr.mxu0 0.0
  %179 = vmatpush1.msra.mxu0 0.0
  %180 = vmatprep.subr.mxu0 0.0
  %181 = vmatpush1.msra.mxu0 0.0
  %182 = vmatprep.mubr.f32.mxu0 0.0
  %183 = vmatmul.mubr.f32.gmra.mrb[0].mxu0 %v94
  %v184 = vpop.f32.mrb[0].mxu0
  %v185 = vadd.f32 0.0, %v184
  %v186 = vpop.f32.mrb[0].mxu0
  %187 = vmatprep.mubr.f32.mxu0 0.0
  %188 = vmatmul.mubr.f32.gmra.mrb[0].mxu0 %v99
  %v189 = vpop.f32.mrb[0].mxu0
  %v190 = vadd.f32 0.0, %v189
  %v191 = vpop.f32.mrb[0].mxu0
  %192 = vdwg.mxu0
  %193 = vst [vmem:[%s3] sm:$0xff] %v185
  %194 = vst [vmem:[%s3 + $0x8] sm:$0xff] %v190
  // Predicated region
  $region14: #{libra_linear.1} parent=0 // pred_check
    _
  $region15: #{libra_linear.1} parent=0 // pred_check_branch
    %196 = sbr.rel (0) target = $region17
  $region16: #{libra_linear.1} parent=0 // pred_region
    _
  $region17: #{libra_linear.1} parent=0 // pred_fallthru
    _
  // Predicated region
  $region18: #{libra_linear.1} parent=0 // pred_check
    _
  $region19: #{libra_linear.1} parent=0 // pred_check_branch
    %198 = sbr.rel (0) target = $region21
  $region20: #{libra_linear.1} parent=0 // pred_region
    _
  $region21: #{libra_linear.1} parent=0 // pred_fallthru
    _

</llo_original>
